<compile_context>
chip_gen: v6e
topology: v6e:2x2x1
jax: 0.10.0
libtpu: 0.0.40
codegen_flags: <defaults>
</compile_context>

<pallas_src>
from functools import partial

import jax
import jax.numpy as jnp
from jax import lax
from jax.experimental import pallas as pl
from jax.experimental.pallas import tpu as pltpu


def _temporal_block_kernel(x_ref, w1_ref, w2_ref, b1_ref, b2_ref, *rest,
                           L, K, dil, TB, has_ds):
    """Fused TemporalBlock forward for a tile of TB batch elements (NCL layout).

    x_ref : (TB, Cin, L)
    w1_ref: (2*Cout, K*Cin) if has_ds  -- [conv1 taps ; downsample 1x1 taps]
            (Cout,   K*Cin) otherwise  -- conv1 taps only
    w2_ref: (Cout, K*Cout)             -- conv2 taps
    b1_ref, b2_ref[, bd_ref]: (Cout, 1) f32 biases (post-matmul broadcast add)
    o_ref : (TB, Cout, L)
    """
    if has_ds:
        bd_ref, o_ref = rest
    else:
        (o_ref,) = rest
    Cout = o_ref.shape[1]

    w1 = w1_ref[...]
    w2 = w2_ref[...]
    b1 = b1_ref[...]                               # (Cout, 1) f32
    b2 = b2_ref[...]
    bd = bd_ref[...] if has_ds else None

    # Hoisted lane-index iota + per-shift causal masks (shared by every tap and
    # every batch element; JAX does not CSE broadcasts, so build exactly once).
    col = lax.broadcasted_iota(jnp.int32, (1, L), 1)
    masks = {}
    for k in range(K):
        s = (K - 1 - k) * dil
        if 0 < s < L:
            masks[s] = col >= s

    def causal_cols(v):
        """(C, L) -> (K*C, L): K causally shifted copies, tap-major/channel-minor.

        Row block k, column t holds v[:, t - (K-1-k)*dil] (zero for t < shift).
        Shifts use pltpu.roll (XLU slot) + hoisted masks instead of lane-axis
        concatenation of odd-width slices (which lowers to extra VMEM copies).
        """
        pieces = []
        for k in range(K):
            s = (K - 1 - k) * dil                  # static shift per tap
            if s == 0:
                pieces.append(v)
            elif s >= L:
                pieces.append(jnp.zeros_like(v))
            else:
                r = pltpu.roll(v, shift=s, axis=1)
                pieces.append(jnp.where(masks[s], r, jnp.zeros_like(r)))
        return jnp.concatenate(pieces, axis=0)

    for i in range(TB):                            # small static batch tile
        x = x_ref[i]                               # (Cin, L)
        cdt = x.dtype

        # conv1 (+ folded residual 1x1 when a real downsample exists)
        xcol = causal_cols(x)                      # (K*Cin, L)
        y1 = jnp.dot(w1, xcol, preferred_element_type=jnp.float32)
        if has_ds:
            h = jnp.maximum(y1[:Cout] + b1, 0.0)   # ReLU(conv1(x)+b1); dropout=id
            res = y1[Cout:] + bd                   # downsample(x) + bd
        else:
            h = jnp.maximum(y1 + b1, 0.0)
            res = x.astype(jnp.float32)            # identity residual (Cin == Cout)

        # conv2
        hcol = causal_cols(h.astype(cdt))          # (K*Cout, L)
        y2 = jnp.dot(w2, hcol, preferred_element_type=jnp.float32) + b2
        y2 = jnp.maximum(y2, 0.0)                  # ReLU(conv2+b2); dropout=id

        o_ref[i] = jnp.maximum(y2 + res, 0.0).astype(o_ref.dtype)


def weight_norm_effective(v, g):
    """PyTorch weight_norm (dim=0): w = g * v / ||v||, norm over (in, k)."""
    norm = jnp.sqrt(jnp.sum(v.astype(jnp.float32) ** 2, axis=(1, 2), keepdims=True))
    return (g * v / norm).astype(v.dtype)


def temporal_block_forward(x_ncl, params, *, kernel_size, stride, dilation, padding,
                           compute_dtype=None, batch_tile=None):
    """x_ncl: (B, Cin, L) like PyTorch Conv1d input.  Returns (B, Cout, L).

    compute_dtype: MXU operand dtype (default: x dtype).  For HBM-bound
    production sizes pass jnp.bfloat16 (accumulation stays f32); the demo keeps
    f32 so the check against the f32 reference stays tight.
    """
    assert stride == 1, "TemporalBlock is used with stride=1"
    assert padding == dilation * (kernel_size - 1), (
        "conv+chomp only reduces to a causal conv for padding == dilation*(K-1)")

    w1, b1, w2, b2, wd, bd = params   # PyTorch layouts: w1 (Cout,Cin,K), wd (Cout,Cin,1)
    B, Cin, L = x_ncl.shape
    Cout = w1.shape[0]
    K = kernel_size
    has_ds = wd is not None
    cdt = jnp.dtype(compute_dtype) if compute_dtype is not None else x_ncl.dtype
    out_dt = x_ncl.dtype

    # ---- weight prep (tiny tensors; done once, outside the kernel) ----
    # conv taps laid out tap-major / channel-minor to match the im2col row order
    w1c = jnp.transpose(w1, (0, 2, 1)).reshape(Cout, K * Cin).astype(jnp.float32)
    w2c = jnp.transpose(w2, (0, 2, 1)).reshape(Cout, K * Cout).astype(jnp.float32)
    if has_ds:
        # the residual 1x1 conv reads the unshifted tap (k = K-1) of the same
        # im2col, so it rides the conv1 matmul for free (same RHS).
        wres = jnp.zeros((Cout, K * Cin), jnp.float32)
        wres = wres.at[:, (K - 1) * Cin:].set(wd[:, :, 0].astype(jnp.float32))
        wf1 = jnp.concatenate([w1c, wres], axis=0).astype(cdt)      # (2*Cout, K*Cin)
        bdv = bd.astype(jnp.float32).reshape(Cout, 1)
    else:
        # identity residual (Cin == Cout): no identity matmul through the MXU,
        # the kernel adds x directly on the VPU.
        assert Cin == Cout, "downsample=None requires n_inputs == n_outputs"
        wf1 = w1c.astype(cdt)                                        # (Cout, K*Cin)
        bdv = None
    wf2 = w2c.astype(cdt)                                            # (Cout, K*Cout)
    b1v = b1.astype(jnp.float32).reshape(Cout, 1)
    b2v = b2.astype(jnp.float32).reshape(Cout, 1)

    # ---- batch tile: amortize the ~0.35us per-grid-step overhead ----
    if batch_tile is None:
        batch_tile = next(t for t in (8, 4, 2, 1) if B % t == 0)
    TB = batch_tile
    assert B % TB == 0

    x_in = x_ncl.astype(cdt)

    kern = partial(_temporal_block_kernel, L=L, K=K, dil=dilation, TB=TB,
                   has_ds=has_ds)

    args = [x_in, wf1, wf2, b1v, b2v]
    in_specs = [
        pl.BlockSpec((TB, Cin, L), lambda b: (b, 0, 0)),
        pl.BlockSpec(wf1.shape, lambda b: (0, 0)),      # resident across grid
        pl.BlockSpec(wf2.shape, lambda b: (0, 0)),
        pl.BlockSpec((Cout, 1), lambda b: (0, 0)),
        pl.BlockSpec((Cout, 1), lambda b: (0, 0)),
    ]
    if has_ds:
        args.append(bdv)
        in_specs.append(pl.BlockSpec((Cout, 1), lambda b: (0, 0)))

    # rough per-step VMEM footprint -> explicit scoped-VMEM limit
    it = jnp.dtype(cdt).itemsize
    oit = jnp.dtype(out_dt).itemsize
    per_step = (
        2 * TB * (Cin * it + Cout * oit) * L            # double-buffered x / out
        + (wf1.size + wf2.size) * it + 3 * Cout * 4     # resident weights + biases
        + K * (Cin + Cout) * L * it                     # xcol + hcol
        + (wf1.shape[0] + 2 * Cout) * L * 4)            # f32 y1 / h / y2+res
    vmem_limit = int(min(max(2 * per_step, 32 * 1024 * 1024), 100 * 1024 * 1024))

    flops = 2 * B * L * (wf1.shape[0] * K * Cin + Cout * K * Cout)
    bytes_accessed = int(x_in.size * it + B * Cout * L * oit
                         + (wf1.size + wf2.size) * it + 3 * Cout * 4)

    return pl.pallas_call(
        kern,
        out_shape=jax.ShapeDtypeStruct((B, Cout, L), out_dt),
        grid_spec=pltpu.PrefetchScalarGridSpec(
            num_scalar_prefetch=0,
            grid=(B // TB,),                            # batch-parallel, pipelined DMA
            in_specs=in_specs,
            out_specs=pl.BlockSpec((TB, Cout, L), lambda b: (b, 0, 0)),
        ),
        compiler_params=pltpu.CompilerParams(
            dimension_semantics=("parallel",),
            vmem_limit_bytes=vmem_limit),
        cost_estimate=pl.CostEstimate(
            flops=flops, transcendentals=0, bytes_accessed=bytes_accessed),
    )(*args)


# ----------------------------- reference (pure JAX) -----------------------------
def _conv1d_chomp_ref(x_ncl, w, b, *, dilation, padding):
    dn = ('NCH', 'OIH', 'NCH')
    y = lax.conv_general_dilated(
        x_ncl.astype(jnp.float32), w.astype(jnp.float32),
        window_strides=(1,), padding=[(padding, padding)],
        rhs_dilation=(dilation,), dimension_numbers=dn)
    y = y + b.astype(jnp.float32)[None, :, None]
    return y[:, :, :y.shape[-1] - padding]           # Chomp1d

def temporal_block_ref(x_ncl, params, *, kernel_size, stride, dilation, padding):
    w1, b1, w2, b2, wd, bd = params
    h = jnp.maximum(_conv1d_chomp_ref(x_ncl, w1, b1, dilation=dilation, padding=padding), 0.0)
    h = jnp.maximum(_conv1d_chomp_ref(h, w2, b2, dilation=dilation, padding=padding), 0.0)
    if wd is None:
        res = x_ncl.astype(jnp.float32)
    else:
        res = lax.conv_general_dilated(
            x_ncl.astype(jnp.float32), wd.astype(jnp.float32),
            window_strides=(1,), padding=[(0, 0)],
            dimension_numbers=('NCH', 'OIH', 'NCH'))
        res = res + bd.astype(jnp.float32)[None, :, None]
    return jnp.maximum(h + res, 0.0)


# --------------------------------- demo / main ---------------------------------
def _make_params(key, cin, cout, K):
    k1v, k1b, k2v, k2b, kdv, kdb = jax.random.split(key, 6)
    # weight_norm parametrized conv weights: v ~ N(0, 0.01), g = ||v|| (default init)
    v1 = 0.01 * jax.random.normal(k1v, (cout, cin, K), jnp.float32)
    g1 = jnp.sqrt(jnp.sum(v1 ** 2, axis=(1, 2), keepdims=True))
    w1 = weight_norm_effective(v1, g1)
    b1 = 0.1 * jax.random.normal(k1b, (cout,), jnp.float32)
    v2 = 0.01 * jax.random.normal(k2v, (cout, cout, K), jnp.float32)
    g2 = jnp.sqrt(jnp.sum(v2 ** 2, axis=(1, 2), keepdims=True))
    w2 = weight_norm_effective(v2, g2)
    b2 = 0.1 * jax.random.normal(k2b, (cout,), jnp.float32)
    if cin != cout:
        wd = 0.01 * jax.random.normal(kdv, (cout, cin, 1), jnp.float32)
        bd = 0.1 * jax.random.normal(kdb, (cout,), jnp.float32)
    else:
        wd, bd = None, None
    return (w1, b1, w2, b2, wd, bd)


if __name__ == "__main__":
    key = jax.random.PRNGKey(0)
    B, L = 2, 128

    # config 1: Cin != Cout (real 1x1 downsample, folded into conv1 matmul)
    # config 2: Cin == Cout (identity residual, VPU add path)
    for (cin, cout, K, dil) in [(4, 8, 3, 2), (8, 8, 3, 1)]:
        key, kp, kx = jax.random.split(key, 3)
        padding = (K - 1) * dil
        x = jax.random.normal(kx, (B, cin, L), dtype=jnp.float32)   # NCL like PyTorch
        params = _make_params(kp, cin, cout, K)

        out = temporal_block_forward(
            x, params, kernel_size=K, stride=1, dilation=dil, padding=padding)
        out = jax.block_until_ready(out)

        ref = temporal_block_ref(
            x, params, kernel_size=K, stride=1, dilation=dil, padding=padding)

        assert out.shape == (B, cout, L), out.shape
        assert jnp.allclose(out, ref, rtol=1e-4, atol=1e-5), (
            (cin, cout, K, dil), float(jnp.max(jnp.abs(out - ref))))

    print("KERNEL_OK")
</pallas_src>

<mosaic_0001>
module attributes {stable_mosaic.version = 11 : i64} {
  func.func @_temporal_block_kernel(%arg0: i32, %arg1: memref<2x4x128xf32, #tpu.memory_space<vmem>>, %arg2: memref<16x12xf32, #tpu.memory_space<vmem>>, %arg3: memref<8x24xf32, #tpu.memory_space<vmem>>, %arg4: memref<8x1xf32, #tpu.memory_space<vmem>>, %arg5: memref<8x1xf32, #tpu.memory_space<vmem>>, %arg6: memref<8x1xf32, #tpu.memory_space<vmem>>, %arg7: memref<2x8x128xf32, #tpu.memory_space<vmem>>) attributes {dimension_semantics = [#tpu.dimension_semantics<parallel>], iteration_bounds = array<i64: 1>, scalar_prefetch = 0 : i64, scratch_operands = 0 : i64, tpu.core_type = #tpu.core_type<tc>, window_params = [{transform_indices = @transform_0, window_bounds = array<i64: 2, 4, 128>}, {pipeline_mode = #tpu.pipeline_mode<synchronous>, transform_indices = @transform_1, window_bounds = array<i64: 16, 12>}, {pipeline_mode = #tpu.pipeline_mode<synchronous>, transform_indices = @transform_2, window_bounds = array<i64: 8, 24>}, {pipeline_mode = #tpu.pipeline_mode<synchronous>, transform_indices = @transform_3, window_bounds = array<i64: 8, 1>}, {pipeline_mode = #tpu.pipeline_mode<synchronous>, transform_indices = @transform_4, window_bounds = array<i64: 8, 1>}, {pipeline_mode = #tpu.pipeline_mode<synchronous>, transform_indices = @transform_5, window_bounds = array<i64: 8, 1>}, {transform_indices = @transform_6, window_bounds = array<i64: 2, 8, 128>}]} {
    %c0 = arith.constant 0 : index
    %c0_0 = arith.constant 0 : index
    %0 = vector.load %arg2[%c0, %c0_0] : memref<16x12xf32, #tpu.memory_space<vmem>>, vector<16x12xf32>
    %c0_1 = arith.constant 0 : index
    %c0_2 = arith.constant 0 : index
    %1 = vector.load %arg3[%c0_1, %c0_2] : memref<8x24xf32, #tpu.memory_space<vmem>>, vector<8x24xf32>
    %c0_3 = arith.constant 0 : index
    %c0_4 = arith.constant 0 : index
    %2 = vector.load %arg4[%c0_3, %c0_4] : memref<8x1xf32, #tpu.memory_space<vmem>>, vector<8x1xf32>
    %c0_5 = arith.constant 0 : index
    %c0_6 = arith.constant 0 : index
    %3 = vector.load %arg5[%c0_5, %c0_6] : memref<8x1xf32, #tpu.memory_space<vmem>>, vector<8x1xf32>
    %c0_7 = arith.constant 0 : index
    %c0_8 = arith.constant 0 : index
    %4 = vector.load %arg6[%c0_7, %c0_8] : memref<8x1xf32, #tpu.memory_space<vmem>>, vector<8x1xf32>
    %5 = tpu.iota {dimensions = array<i32: 1>} : vector<1x128xi32>
    %c4_i32 = arith.constant 4 : i32
    %6 = vector.broadcast %c4_i32 : i32 to vector<1x128xi32>
    %7 = arith.cmpi sge, %5, %6 : vector<1x128xi32>
    %c2_i32 = arith.constant 2 : i32
    %8 = vector.broadcast %c2_i32 : i32 to vector<1x128xi32>
    %9 = arith.cmpi sge, %5, %8 : vector<1x128xi32>
    %c0_9 = arith.constant 0 : index
    %c0_10 = arith.constant 0 : index
    %c0_11 = arith.constant 0 : index
    %10 = vector.load %arg1[%c0_9, %c0_10, %c0_11] : memref<2x4x128xf32, #tpu.memory_space<vmem>>, vector<1x4x128xf32>
    %11 = vector.shape_cast %10 : vector<1x4x128xf32> to vector<4x128xf32>
    %c4_i32_12 = arith.constant 4 : i32
    %12 = tpu.dynamic_rotate %11 by %c4_i32_12 dim 1 : vector<4x128xf32>, i32 -> vector<4x128xf32>
    %cst = arith.constant 0.000000e+00 : f32
    %13 = vector.broadcast %cst : f32 to vector<4x128xf32>
    %14 = vector.shape_cast %7 : vector<1x128xi1> to vector<1x128xi1>
    %15 = vector.broadcast %14 : vector<1x128xi1> to vector<4x128xi1>
    %16 = arith.select %15, %12, %13 : vector<4x128xi1>, vector<4x128xf32>
    %c2_i32_13 = arith.constant 2 : i32
    %17 = tpu.dynamic_rotate %11 by %c2_i32_13 dim 1 : vector<4x128xf32>, i32 -> vector<4x128xf32>
    %cst_14 = arith.constant 0.000000e+00 : f32
    %18 = vector.broadcast %cst_14 : f32 to vector<4x128xf32>
    %19 = vector.shape_cast %9 : vector<1x128xi1> to vector<1x128xi1>
    %20 = vector.broadcast %19 : vector<1x128xi1> to vector<4x128xi1>
    %21 = arith.select %20, %17, %18 : vector<4x128xi1>, vector<4x128xf32>
    %22 = tpu.concatenate %16, %21, %11 in 0 : vector<4x128xf32>, vector<4x128xf32>, vector<4x128xf32> -> vector<12x128xf32>
    %cst_15 = arith.constant dense<0.000000e+00> : vector<16x128xf32>
    %23 = tpu.matmul %0, %22, %cst_15 {dimension_numbers = #tpu.dot_dimension_numbers<[1], [0], [0], [1], [0, 0, 1, 1], [], []>} : vector<16x12xf32>, vector<12x128xf32>, vector<16x128xf32> -> vector<16x128xf32>
    %24 = vector.extract_strided_slice %23 {offsets = [0, 0], sizes = [8, 128], strides = [1, 1]} : vector<16x128xf32> to vector<8x128xf32>
    %25 = vector.broadcast %2 : vector<8x1xf32> to vector<8x128xf32>
    %26 = arith.addf %24, %25 : vector<8x128xf32>
    %cst_16 = arith.constant 0.000000e+00 : f32
    %27 = vector.broadcast %cst_16 : f32 to vector<8x128xf32>
    %28 = arith.maximumf %26, %27 : vector<8x128xf32>
    %29 = vector.extract_strided_slice %23 {offsets = [8, 0], sizes = [8, 128], strides = [1, 1]} : vector<16x128xf32> to vector<8x128xf32>
    %30 = vector.broadcast %4 : vector<8x1xf32> to vector<8x128xf32>
    %31 = arith.addf %29, %30 : vector<8x128xf32>
    %c4_i32_17 = arith.constant 4 : i32
    %32 = tpu.dynamic_rotate %28 by %c4_i32_17 dim 1 : vector<8x128xf32>, i32 -> vector<8x128xf32>
    %cst_18 = arith.constant 0.000000e+00 : f32
    %33 = vector.broadcast %cst_18 : f32 to vector<8x128xf32>
    %34 = vector.shape_cast %7 : vector<1x128xi1> to vector<1x128xi1>
    %35 = vector.broadcast %34 : vector<1x128xi1> to vector<8x128xi1>
    %36 = arith.select %35, %32, %33 : vector<8x128xi1>, vector<8x128xf32>
    %c2_i32_19 = arith.constant 2 : i32
    %37 = tpu.dynamic_rotate %28 by %c2_i32_19 dim 1 : vector<8x128xf32>, i32 -> vector<8x128xf32>
    %cst_20 = arith.constant 0.000000e+00 : f32
    %38 = vector.broadcast %cst_20 : f32 to vector<8x128xf32>
    %39 = vector.shape_cast %9 : vector<1x128xi1> to vector<1x128xi1>
    %40 = vector.broadcast %39 : vector<1x128xi1> to vector<8x128xi1>
    %41 = arith.select %40, %37, %38 : vector<8x128xi1>, vector<8x128xf32>
    %42 = tpu.concatenate %36, %41, %28 in 0 : vector<8x128xf32>, vector<8x128xf32>, vector<8x128xf32> -> vector<24x128xf32>
    %cst_21 = arith.constant dense<0.000000e+00> : vector<8x128xf32>
    %43 = tpu.matmul %1, %42, %cst_21 {dimension_numbers = #tpu.dot_dimension_numbers<[1], [0], [0], [1], [0, 0, 1, 1], [], []>} : vector<8x24xf32>, vector<24x128xf32>, vector<8x128xf32> -> vector<8x128xf32>
    %44 = vector.broadcast %3 : vector<8x1xf32> to vector<8x128xf32>
    %45 = arith.addf %43, %44 : vector<8x128xf32>
    %cst_22 = arith.constant 0.000000e+00 : f32
    %46 = vector.broadcast %cst_22 : f32 to vector<8x128xf32>
    %47 = arith.maximumf %45, %46 : vector<8x128xf32>
    %48 = arith.addf %47, %31 : vector<8x128xf32>
    %cst_23 = arith.constant 0.000000e+00 : f32
    %49 = vector.broadcast %cst_23 : f32 to vector<8x128xf32>
    %50 = arith.maximumf %48, %49 : vector<8x128xf32>
    %c0_24 = arith.constant 0 : index
    %c0_25 = arith.constant 0 : index
    %c0_26 = arith.constant 0 : index
    %51 = vector.load %arg7[%c0_24, %c0_25, %c0_26] : memref<2x8x128xf32, #tpu.memory_space<vmem>>, vector<1x8x128xf32>
    %52 = vector.shape_cast %51 : vector<1x8x128xf32> to vector<8x128xf32>
    %53 = vector.shape_cast %50 : vector<8x128xf32> to vector<1x8x128xf32>
    tpu.vector_store %arg7[%c0_24, %c0_25, %c0_26], %53 {strides = array<i32>} : memref<2x8x128xf32, #tpu.memory_space<vmem>>, vector<1x8x128xf32>,
    %c1 = arith.constant 1 : index
    %c0_27 = arith.constant 0 : index
    %c0_28 = arith.constant 0 : index
    %54 = vector.load %arg1[%c1, %c0_27, %c0_28] : memref<2x4x128xf32, #tpu.memory_space<vmem>>, vector<1x4x128xf32>
    %55 = vector.shape_cast %54 : vector<1x4x128xf32> to vector<4x128xf32>
    %c4_i32_29 = arith.constant 4 : i32
    %56 = tpu.dynamic_rotate %55 by %c4_i32_29 dim 1 : vector<4x128xf32>, i32 -> vector<4x128xf32>
    %cst_30 = arith.constant 0.000000e+00 : f32
    %57 = vector.broadcast %cst_30 : f32 to vector<4x128xf32>
    %58 = vector.shape_cast %7 : vector<1x128xi1> to vector<1x128xi1>
    %59 = vector.broadcast %58 : vector<1x128xi1> to vector<4x128xi1>
    %60 = arith.select %59, %56, %57 : vector<4x128xi1>, vector<4x128xf32>
    %c2_i32_31 = arith.constant 2 : i32
    %61 = tpu.dynamic_rotate %55 by %c2_i32_31 dim 1 : vector<4x128xf32>, i32 -> vector<4x128xf32>
    %cst_32 = arith.constant 0.000000e+00 : f32
    %62 = vector.broadcast %cst_32 : f32 to vector<4x128xf32>
    %63 = vector.shape_cast %9 : vector<1x128xi1> to vector<1x128xi1>
    %64 = vector.broadcast %63 : vector<1x128xi1> to vector<4x128xi1>
    %65 = arith.select %64, %61, %62 : vector<4x128xi1>, vector<4x128xf32>
    %66 = tpu.concatenate %60, %65, %55 in 0 : vector<4x128xf32>, vector<4x128xf32>, vector<4x128xf32> -> vector<12x128xf32>
    %cst_33 = arith.constant dense<0.000000e+00> : vector<16x128xf32>
    %67 = tpu.matmul %0, %66, %cst_33 {dimension_numbers = #tpu.dot_dimension_numbers<[1], [0], [0], [1], [0, 0, 1, 1], [], []>} : vector<16x12xf32>, vector<12x128xf32>, vector<16x128xf32> -> vector<16x128xf32>
    %68 = vector.extract_strided_slice %67 {offsets = [0, 0], sizes = [8, 128], strides = [1, 1]} : vector<16x128xf32> to vector<8x128xf32>
    %69 = vector.broadcast %2 : vector<8x1xf32> to vector<8x128xf32>
    %70 = arith.addf %68, %69 : vector<8x128xf32>
    %cst_34 = arith.constant 0.000000e+00 : f32
    %71 = vector.broadcast %cst_34 : f32 to vector<8x128xf32>
    %72 = arith.maximumf %70, %71 : vector<8x128xf32>
    %73 = vector.extract_strided_slice %67 {offsets = [8, 0], sizes = [8, 128], strides = [1, 1]} : vector<16x128xf32> to vector<8x128xf32>
    %74 = vector.broadcast %4 : vector<8x1xf32> to vector<8x128xf32>
    %75 = arith.addf %73, %74 : vector<8x128xf32>
    %c4_i32_35 = arith.constant 4 : i32
    %76 = tpu.dynamic_rotate %72 by %c4_i32_35 dim 1 : vector<8x128xf32>, i32 -> vector<8x128xf32>
    %cst_36 = arith.constant 0.000000e+00 : f32
    %77 = vector.broadcast %cst_36 : f32 to vector<8x128xf32>
    %78 = vector.shape_cast %7 : vector<1x128xi1> to vector<1x128xi1>
    %79 = vector.broadcast %78 : vector<1x128xi1> to vector<8x128xi1>
    %80 = arith.select %79, %76, %77 : vector<8x128xi1>, vector<8x128xf32>
    %c2_i32_37 = arith.constant 2 : i32
    %81 = tpu.dynamic_rotate %72 by %c2_i32_37 dim 1 : vector<8x128xf32>, i32 -> vector<8x128xf32>
    %cst_38 = arith.constant 0.000000e+00 : f32
    %82 = vector.broadcast %cst_38 : f32 to vector<8x128xf32>
    %83 = vector.shape_cast %9 : vector<1x128xi1> to vector<1x128xi1>
    %84 = vector.broadcast %83 : vector<1x128xi1> to vector<8x128xi1>
    %85 = arith.select %84, %81, %82 : vector<8x128xi1>, vector<8x128xf32>
    %86 = tpu.concatenate %80, %85, %72 in 0 : vector<8x128xf32>, vector<8x128xf32>, vector<8x128xf32> -> vector<24x128xf32>
    %cst_39 = arith.constant dense<0.000000e+00> : vector<8x128xf32>
    %87 = tpu.matmul %1, %86, %cst_39 {dimension_numbers = #tpu.dot_dimension_numbers<[1], [0], [0], [1], [0, 0, 1, 1], [], []>} : vector<8x24xf32>, vector<24x128xf32>, vector<8x128xf32> -> vector<8x128xf32>
    %88 = vector.broadcast %3 : vector<8x1xf32> to vector<8x128xf32>
    %89 = arith.addf %87, %88 : vector<8x128xf32>
    %cst_40 = arith.constant 0.000000e+00 : f32
    %90 = vector.broadcast %cst_40 : f32 to vector<8x128xf32>
    %91 = arith.maximumf %89, %90 : vector<8x128xf32>
    %92 = arith.addf %91, %75 : vector<8x128xf32>
    %cst_41 = arith.constant 0.000000e+00 : f32
    %93 = vector.broadcast %cst_41 : f32 to vector<8x128xf32>
    %94 = arith.maximumf %92, %93 : vector<8x128xf32>
    %c1_42 = arith.constant 1 : index
    %c0_43 = arith.constant 0 : index
    %c0_44 = arith.constant 0 : index
    %95 = vector.load %arg7[%c1_42, %c0_43, %c0_44] : memref<2x8x128xf32, #tpu.memory_space<vmem>>, vector<1x8x128xf32>
    %96 = vector.shape_cast %95 : vector<1x8x128xf32> to vector<8x128xf32>
    %97 = vector.shape_cast %94 : vector<8x128xf32> to vector<1x8x128xf32>
    tpu.vector_store %arg7[%c1_42, %c0_43, %c0_44], %97 {strides = array<i32>} : memref<2x8x128xf32, #tpu.memory_space<vmem>>, vector<1x8x128xf32>,
    return
  }
  func.func @transform_0(%arg0: i32) -> (i32, i32, i32) {
    %c0_i32 = arith.constant 0 : i32
    %c0_i32_0 = arith.constant 0 : i32
    %c0_i32_1 = arith.constant 0 : i32
    return %arg0, %c0_i32, %c0_i32_0 : i32, i32, i32
  }
  func.func @transform_1(%arg0: i32) -> (i32, i32) {
    %c0_i32 = arith.constant 0 : i32
    %c0_i32_0 = arith.constant 0 : i32
    %c0_i32_1 = arith.constant 0 : i32
    return %c0_i32, %c0_i32_0 : i32, i32
  }
  func.func @transform_2(%arg0: i32) -> (i32, i32) {
    %c0_i32 = arith.constant 0 : i32
    %c0_i32_0 = arith.constant 0 : i32
    %c0_i32_1 = arith.constant 0 : i32
    return %c0_i32, %c0_i32_0 : i32, i32
  }
  func.func @transform_3(%arg0: i32) -> (i32, i32) {
    %c0_i32 = arith.constant 0 : i32
    %c0_i32_0 = arith.constant 0 : i32
    %c0_i32_1 = arith.constant 0 : i32
    return %c0_i32, %c0_i32_0 : i32, i32
  }
  func.func @transform_4(%arg0: i32) -> (i32, i32) {
    %c0_i32 = arith.constant 0 : i32
    %c0_i32_0 = arith.constant 0 : i32
    %c0_i32_1 = arith.constant 0 : i32
    return %c0_i32, %c0_i32_0 : i32, i32
  }
  func.func @transform_5(%arg0: i32) -> (i32, i32) {
    %c0_i32 = arith.constant 0 : i32
    %c0_i32_0 = arith.constant 0 : i32
    %c0_i32_1 = arith.constant 0 : i32
    return %c0_i32, %c0_i32_0 : i32, i32
  }
  func.func @transform_6(%arg0: i32) -> (i32, i32, i32) {
    %c0_i32 = arith.constant 0 : i32
    %c0_i32_0 = arith.constant 0 : i32
    %c0_i32_1 = arith.constant 0 : i32
    return %arg0, %c0_i32, %c0_i32_0 : i32, i32, i32
  }
}

</mosaic_0001>

<llo_original>
// kernel: tpu_custom_call.1
$region0: #{tpu_custom_call.1}
  #allocation0 [shape = 'u32[]', space=smem, size = 0x4, offset = 0x4, fixed_abs, tag = 'smem constant byte address 0x4 - core index']
  #allocation1 [shape = 'u32[144,128]{1,0:T(1,128)}', space=vmem, size = 0x12000, scoped, tag = 'internal scratch']
  %s0 = inlined_call_operand.vmem [shape: f32[2,4,128], index: 0, kind: input, shape index: {}]
  %s1 = inlined_call_operand.vmem [shape: f32[16,12], index: 1, kind: input, shape index: {}]
  %s2 = inlined_call_operand.hbm [shape: f32[8,24], index: 2, kind: input, shape index: {}]
  %s3 = inlined_call_operand.vmem [shape: f32[8,1], index: 3, kind: input, shape index: {}]
  %s4 = inlined_call_operand.vmem [shape: f32[8,1], index: 4, kind: input, shape index: {}]
  %s5 = inlined_call_operand.vmem [shape: f32[8,1], index: 5, kind: input, shape index: {}]
  %s6 = inlined_call_operand.hbm [shape: f32[2,8,128], index: 6, kind: output, shape index: {}]
  %s7 = sld [smem:[#allocation0]]
  $region38: #{tpu_custom_call.1} parent=0
    _
  %s9 = ssub.s32 1, %s7
  %s10 = scalar_select 0, %s9, %s7
  $region1: #{tpu_custom_call.1} parent=0
    #allocation2 [shape = 'u8[4096]{0}', space=vmem, size = 0x1000, scoped, tag = 'input window, operand 2, single buffered']
    #allocation3 [shape = 's32[1]{0}', space=sflag, size = 0x4, scoped, tag = 'scoped memory for tpu_custom_call.1']
    #allocation4 [shape = 's32[1]{0}', space=sflag, size = 0x4, scoped, tag = 'scoped memory for tpu_custom_call.1']
    #allocation5 [shape = 'u8[8192]{0}', space=vmem, size = 0x2000, scoped, tag = 'output window, operand 0, single buffered']
    %11 = vsyncpa [#allocation3], 0
    %12 = vsyncpa [#allocation4], 0
    // Predicated region
    $region2: #{tpu_custom_call.1} parent=1 // pred_check
      _
    $region3: #{tpu_custom_call.1} parent=1 // pred_check_branch
      %14 = sbr.rel (0) target = $region5
    $region4: #{tpu_custom_call.1} parent=1 // pred_region
      _
    $region5: #{tpu_custom_call.1} parent=1 // pred_fallthru
      _
    // Predicated region
    $region6: #{tpu_custom_call.1} parent=1 // pred_check
      _
    $region7: #{tpu_custom_call.1} parent=1 // pred_check_branch
      %16 = sbr.rel (0) target = $region9
    $region8: #{tpu_custom_call.1} parent=1 // pred_region
      _
    $region9: #{tpu_custom_call.1} parent=1 // pred_fallthru
      _
    // Predicated region
    $region10: #{tpu_custom_call.1} parent=1 // pred_check
      _
    $region11: #{tpu_custom_call.1} parent=1 // pred_check_branch
      %18 = sbr.rel (0) target = $region13
    $region12: #{tpu_custom_call.1} parent=1 // pred_region
      %s20 = ssub.s32 128, 128
      %21 = vsyncadd [#allocation3], %s20
      %s23 = sshll.u32 [#allocation2], 4
      %s24 = int_to_ptr.vmem [resolvable:$true] %s23
      %26 = dma.hbm_to_vmem [thread:$0]  %s2, 128, %s24, [#allocation3]
    $region13: #{tpu_custom_call.1} parent=1 // pred_fallthru
      _
    // Predicated region
    $region14: #{tpu_custom_call.1} parent=1 // pred_check
      _
    $region15: #{tpu_custom_call.1} parent=1 // pred_check_branch
      %28 = sbr.rel (0) target = $region17
    $region16: #{tpu_custom_call.1} parent=1 // pred_region
      _
    $region17: #{tpu_custom_call.1} parent=1 // pred_fallthru
      _
    // Predicated region
    $region18: #{tpu_custom_call.1} parent=1 // pred_check
      _
    $region19: #{tpu_custom_call.1} parent=1 // pred_check_branch
      %30 = sbr.rel (0) target = $region21
    $region20: #{tpu_custom_call.1} parent=1 // pred_region
      _
    $region21: #{tpu_custom_call.1} parent=1 // pred_fallthru
      _
    // Predicated region
    $region22: #{tpu_custom_call.1} parent=1 // pred_check
      _
    $region23: #{tpu_custom_call.1} parent=1 // pred_check_branch
      %32 = sbr.rel (0) target = $region25
    $region24: #{tpu_custom_call.1} parent=1 // pred_region
      _
    $region25: #{tpu_custom_call.1} parent=1 // pred_fallthru
      _
    // Predicated region
    $region26: #{tpu_custom_call.1} parent=1 // pred_check
      _
    $region27: #{tpu_custom_call.1} parent=1 // pred_check_branch
      %34 = sbr.rel (0) target = $region29
    $region28: #{tpu_custom_call.1} parent=1 // pred_region
      %35 = dma.done [#allocation3], 128
    $region29: #{tpu_custom_call.1} parent=1 // pred_fallthru
      _
    %v36 = vld [vmem:[%s1] sm:$0xff]
    %v37 = vld [vmem:[%s1 + $0x8] sm:$0xff]
    %v38 = vld [vmem:[#allocation2] sm:$0xff]
    %v39 = vld [vmem:[%s3] sm:$0xff]
    %v40 = vld [vmem:[%s4] sm:$0xff]
    %v41 = vld [vmem:[%s5] sm:$0xff]
    %v42 = vlaneseq
    %v43 = vand.u32 %v42, 127
    %vm44 = vcmp.ge.s32.totalorder %v43, 4
    %vm45 = vcmp.ge.s32.totalorder %v43, 2
    %v46 = vld [vmem:[%s0] sm:$0xf]
    %47 = vrot.lane.b32.xlu0 %v46, 4
    %v48 = vpop.permute.xlu0 %47
    %v49 = vsel %vm44, 1, 0
    %vm50 = vcmp.eq.s32.totalorder %v49, 1
    %v51 = vsel %vm50, %v48, 0.0
    %52 = vrot.lane.b32.xlu0 %v46, 2
    %v53 = vpop.permute.xlu0 %52
    %v54 = vsel %vm45, 1, 0
    %vm55 = vcmp.eq.s32.totalorder %v54, 1
    %v56 = vsel %vm55, %v53, 0.0
    %v58 = vrot.slane %v56, 4
    %vm60 = vcmask 1043456
    %v61 = vsel %vm60, %v51, %v58
    %vm62 = vcmask 97280
    %v64 = vsel %vm62, %v36, 0
    %v67 = vsel %vm62, %v37, 0
    %v70 = vsel %vm60, %v46, 0
    %72 = vmatprep.subr.mxu0 0.0
    %73 = vmatpush1.msra.mxu0 0.0
    %74 = vmatprep.subr.mxu0 0.0
    %75 = vmatpush1.msra.mxu0 0.0
    %76 = vmatprep.subr.mxu0 0.0
    %77 = vmatpush1.msra.mxu0 0.0
    %78 = vmatprep.subr.mxu0 0.0
    %79 = vmatpush1.msra.mxu0 0.0
    %80 = vmatprep.subr.mxu0 0.0
    %81 = vmatpush1.msra.mxu0 0.0
    %82 = vmatprep.subr.mxu0 0.0
    %83 = vmatpush1.msra.mxu0 0.0
    %84 = vmatprep.subr.mxu0 0.0
    %85 = vmatpush1.msra.mxu0 0.0
    %86 = vmatprep.subr.mxu0 0.0
    %87 = vmatpush1.msra.mxu0 0.0
    %88 = vmatprep.subr.mxu0 0.0
    %89 = vmatpush1.msra.mxu0 0.0
    %90 = vmatprep.subr.mxu0 0.0
    %91 = vmatpush1.msra.mxu0 0.0
    %92 = vmatprep.subr.mxu0 0.0
    %93 = vmatpush1.msra.mxu0 0.0
    %94 = vmatprep.subr.mxu0 0.0
    %95 = vmatpush1.msra.mxu0 0.0
    %96 = vmatprep.subr.mxu0 0.0
    %97 = vmatpush1.msra.mxu0 0.0
    %98 = vmatprep.subr.mxu0 0.0
    %99 = vmatpush1.msra.mxu0 0.0
    %100 = vmatprep.subr.mxu0 0.0
    %101 = vmatpush1.msra.mxu0 %v70
    %102 = vmatprep.subr.mxu0 0.0
    %103 = vmatpush1.msra.mxu0 %v61
    %104 = vmatprep.subr.mxu0 0.0
    %105 = vmatpush2.msra.mxu0 0.0
    %106 = vmatprep.subr.mxu0 0.0
    %107 = vmatpush2.msra.mxu0 0.0
    %108 = vmatprep.subr.mxu0 0.0
    %109 = vmatpush2.msra.mxu0 0.0
    %110 = vmatprep.subr.mxu0 0.0
    %111 = vmatpush2.msra.mxu0 0.0
    %112 = vmatprep.subr.mxu0 0.0
    %113 = vmatpush2.msra.mxu0 0.0
    %114 = vmatprep.subr.mxu0 0.0
    %115 = vmatpush2.msra.mxu0 0.0
    %116 = vmatprep.subr.mxu0 0.0
    %117 = vmatpush2.msra.mxu0 0.0
    %118 = vmatprep.subr.mxu0 0.0
    %119 = vmatpush2.msra.mxu0 0.0
    %120 = vmatprep.subr.mxu0 0.0
    %121 = vmatpush2.msra.mxu0 0.0
    %122 = vmatprep.subr.mxu0 0.0
    %123 = vmatpush2.msra.mxu0 0.0
    %124 = vmatprep.subr.mxu0 0.0
    %125 = vmatpush2.msra.mxu0 0.0
    %126 = vmatprep.subr.mxu0 0.0
    %127 = vmatpush2.msra.mxu0 0.0
    %128 = vmatprep.subr.mxu0 0.0
    %129 = vmatpush2.msra.mxu0 0.0
    %130 = vmatprep.subr.mxu0 0.0
    %131 = vmatpush2.msra.mxu0 0.0
    %132 = vmatprep.subr.mxu0 0.0
    %133 = vmatpush2.msra.mxu0 0.0
    %134 = vmatprep.subr.mxu0 0.0
    %135 = vmatpush2.msra.mxu0 0.0
    %136 = vmatprep.mubr.f32.mxu0 0.0
    %137 = vmatmul.mubr.f32.gmra.mxu0 %v64
    %v138 = vpop.f32.mrf.mxu0
    %v139 = vadd.f32 0.0, %v138
    %v140 = vpop.f32.mrf.mxu0
    %141 = vmatprep.mubr.f32.mxu0 0.0
    %142 = vmatmul.mubr.f32.gmra.mxu0 %v67
    %v143 = vpop.f32.mrf.mxu0
    %v144 = vadd.f32 0.0, %v143
    %v145 = vpop.f32.mrf.mxu0
    %146 = vdwg.mxu0
    %148 = vset.pattern.permute.xlu0 0
    %149 = vperm.xlu0 %148, %v39
    %v150 = vpop.permute.xlu0 %149
    %v152 = vadd.f32 %v139, %v150
    %v153 = vmax.f32 %v152, 0.0
    %155 = vset.pattern.permute.xlu0 0
    %156 = vperm.xlu0 %155, %v41
    %v157 = vpop.permute.xlu0 %156
    %v159 = vadd.f32 %v144, %v157
    %160 = vrot.lane.b32.xlu0 %v153, 4
    %v161 = vpop.permute.xlu0 %160
    %v162 = vsel %vm50, %v161, 0.0
    %163 = vrot.lane.b32.xlu0 %v153, 2
    %v164 = vpop.permute.xlu0 %163
    %v165 = vsel %vm55, %v164, 0.0
    %167 = vset.pattern.permute.xlu0 0
    %168 = vperm.xlu0 %167, %v40
    %v169 = vpop.permute.xlu0 %168
    %vm171 = vcmask 195584
    %v173 = vsel %vm171, %v38, 0
    %175 = vmatprep.subr.mxu0 0.0
    %176 = vmatpush1.msra.mxu0 0.0
    %177 = vmatprep.subr.mxu0 0.0
    %178 = vmatpush1.msra.mxu0 0.0
    %179 = vmatprep.subr.mxu0 0.0
    %180 = vmatpush1.msra.mxu0 0.0
    %181 = vmatprep.subr.mxu0 0.0
    %182 = vmatpush1.msra.mxu0 0.0
    %183 = vmatprep.subr.mxu0 0.0
    %184 = vmatpush1.msra.mxu0 0.0
    %185 = vmatprep.subr.mxu0 0.0
    %186 = vmatpush1.msra.mxu0 0.0
    %187 = vmatprep.subr.mxu0 0.0
    %188 = vmatpush1.msra.mxu0 0.0
    %189 = vmatprep.subr.mxu0 0.0
    %190 = vmatpush1.msra.mxu0 0.0
    %191 = vmatprep.subr.mxu0 0.0
    %192 = vmatpush1.msra.mxu0 0.0
    %193 = vmatprep.subr.mxu0 0.0
    %194 = vmatpush1.msra.mxu0 0.0
    %195 = vmatprep.subr.mxu0 0.0
    %196 = vmatpush1.msra.mxu0 0.0
    %197 = vmatprep.subr.mxu0 0.0
    %198 = vmatpush1.msra.mxu0 0.0
    %199 = vmatprep.subr.mxu0 0.0
    %200 = vmatpush1.msra.mxu0 0.0
    %201 = vmatprep.subr.mxu0 0.0
    %202 = vmatpush1.msra.mxu0 %v153
    %203 = vmatprep.subr.mxu0 0.0
    %204 = vmatpush1.msra.mxu0 %v165
    %205 = vmatprep.subr.mxu0 0.0
    %206 = vmatpush1.msra.mxu0 %v162
    %207 = vmatprep.subr.mxu0 0.0
    %208 = vmatpush2.msra.mxu0 0.0
    %209 = vmatprep.subr.mxu0 0.0
    %210 = vmatpush2.msra.mxu0 0.0
    %211 = vmatprep.subr.mxu0 0.0
    %212 = vmatpush2.msra.mxu0 0.0
    %213 = vmatprep.subr.mxu0 0.0
    %214 = vmatpush2.msra.mxu0 0.0
    %215 = vmatprep.subr.mxu0 0.0
    %216 = vmatpush2.msra.mxu0 0.0
    %217 = vmatprep.subr.mxu0 0.0
    %218 = vmatpush2.msra.mxu0 0.0
    %219 = vmatprep.subr.mxu0 0.0
    %220 = vmatpush2.msra.mxu0 0.0
    %221 = vmatprep.subr.mxu0 0.0
    %222 = vmatpush2.msra.mxu0 0.0
    %223 = vmatprep.subr.mxu0 0.0
    %224 = vmatpush2.msra.mxu0 0.0
    %225 = vmatprep.subr.mxu0 0.0
    %226 = vmatpush2.msra.mxu0 0.0
    %227 = vmatprep.subr.mxu0 0.0
    %228 = vmatpush2.msra.mxu0 0.0
    %229 = vmatprep.subr.mxu0 0.0
    %230 = vmatpush2.msra.mxu0 0.0
    %231 = vmatprep.subr.mxu0 0.0
    %232 = vmatpush2.msra.mxu0 0.0
    %233 = vmatprep.subr.mxu0 0.0
    %234 = vmatpush2.msra.mxu0 0.0
    %235 = vmatprep.subr.mxu0 0.0
    %236 = vmatpush2.msra.mxu0 0.0
    %237 = vmatprep.subr.mxu0 0.0
    %238 = vmatpush2.msra.mxu0 0.0
    %239 = vmatprep.mubr.f32.mxu0 0.0
    %240 = vmatmul.mubr.f32.gmra.mxu0 %v173
    %v241 = vpop.f32.mrf.mxu0
    %v242 = vadd.f32 %v169, %v241
    %v243 = vpop.f32.mrf.mxu0
    %244 = vdwg.mxu0
    %v245 = vmax.f32 %v242, 0.0
    %v246 = vadd.f32 %v245, %v159
    %v247 = vmax.f32 %v246, 0.0
    %248 = vst [vmem:[#allocation5] sm:$0xff] %v247
    %s249 = scalar_lea.vmem %s0, 4
    %v250 = vld [vmem:[%s249] sm:$0xf]
    %251 = vrot.lane.b32.xlu0 %v250, 4
    %v252 = vpop.permute.xlu0 %251
    %v253 = vsel %vm50, %v252, 0.0
    %254 = vrot.lane.b32.xlu0 %v250, 2
    %v255 = vpop.permute.xlu0 %254
    %v256 = vsel %vm55, %v255, 0.0
    %v258 = vrot.slane %v256, 4
    %v260 = vsel %vm60, %v253, %v258
    %v262 = vsel %vm60, %v250, 0
    %264 = vmatprep.subr.mxu0 0.0
    %265 = vmatpush1.msra.mxu0 0.0
    %266 = vmatprep.subr.mxu0 0.0
    %267 = vmatpush1.msra.mxu0 0.0
    %268 = vmatprep.subr.mxu0 0.0
    %269 = vmatpush1.msra.mxu0 0.0
    %270 = vmatprep.subr.mxu0 0.0
    %271 = vmatpush1.msra.mxu0 0.0
    %272 = vmatprep.subr.mxu0 0.0
    %273 = vmatpush1.msra.mxu0 0.0
    %274 = vmatprep.subr.mxu0 0.0
    %275 = vmatpush1.msra.mxu0 0.0
    %276 = vmatprep.subr.mxu0 0.0
    %277 = vmatpush1.msra.mxu0 0.0
    %278 = vmatprep.subr.mxu0 0.0
    %279 = vmatpush1.msra.mxu0 0.0
    %280 = vmatprep.subr.mxu0 0.0
    %281 = vmatpush1.msra.mxu0 0.0
    %282 = vmatprep.subr.mxu0 0.0
    %283 = vmatpush1.msra.mxu0 0.0
    %284 = vmatprep.subr.mxu0 0.0
    %285 = vmatpush1.msra.mxu0 0.0
    %286 = vmatprep.subr.mxu0 0.0
    %287 = vmatpush1.msra.mxu0 0.0
    %288 = vmatprep.subr.mxu0 0.0
    %289 = vmatpush1.msra.mxu0 0.0
    %290 = vmatprep.subr.mxu0 0.0
    %291 = vmatpush1.msra.mxu0 0.0
    %292 = vmatprep.subr.mxu0 0.0
    %293 = vmatpush1.msra.mxu0 %v262
    %294 = vmatprep.subr.mxu0 0.0
    %295 = vmatpush1.msra.mxu0 %v260
    %296 = vmatprep.subr.mxu0 0.0
    %297 = vmatpush2.msra.mxu0 0.0
    %298 = vmatprep.subr.mxu0 0.0
    %299 = vmatpush2.msra.mxu0 0.0
    %300 = vmatprep.subr.mxu0 0.0
    %301 = vmatpush2.msra.mxu0 0.0
    %302 = vmatprep.subr.mxu0 0.0
    %303 = vmatpush2.msra.mxu0 0.0
    %304 = vmatprep.subr.mxu0 0.0
    %305 = vmatpush2.msra.mxu0 0.0
    %306 = vmatprep.subr.mxu0 0.0
    %307 = vmatpush2.msra.mxu0 0.0
    %308 = vmatprep.subr.mxu0 0.0
    %309 = vmatpush2.msra.mxu0 0.0
    %310 = vmatprep.subr.mxu0 0.0
    %311 = vmatpush2.msra.mxu0 0.0
    %312 = vmatprep.subr.mxu0 0.0
    %313 = vmatpush2.msra.mxu0 0.0
    %314 = vmatprep.subr.mxu0 0.0
    %315 = vmatpush2.msra.mxu0 0.0
    %316 = vmatprep.subr.mxu0 0.0
    %317 = vmatpush2.msra.mxu0 0.0
    %318 = vmatprep.subr.mxu0 0.0
    %319 = vmatpush2.msra.mxu0 0.0
    %320 = vmatprep.subr.mxu0 0.0
    %321 = vmatpush2.msra.mxu0 0.0
    %322 = vmatprep.subr.mxu0 0.0
    %323 = vmatpush2.msra.mxu0 0.0
    %324 = vmatprep.subr.mxu0 0.0
    %325 = vmatpush2.msra.mxu0 0.0
    %326 = vmatprep.subr.mxu0 0.0
    %327 = vmatpush2.msra.mxu0 0.0
    %328 = vmatprep.mubr.f32.mxu0 0.0
    %329 = vmatmul.mubr.f32.gmra.mxu0 %v64
    %v330 = vpop.f32.mrf.mxu0
    %v331 = vadd.f32 0.0, %v330
    %v332 = vpop.f32.mrf.mxu0
    %333 = vmatprep.mubr.f32.mxu0 0.0
    %334 = vmatmul.mubr.f32.gmra.mxu0 %v67
    %v335 = vpop.f32.mrf.mxu0
    %v336 = vadd.f32 0.0, %v335
    %v337 = vpop.f32.mrf.mxu0
    %338 = vdwg.mxu0
    %v339 = vadd.f32 %v331, %v150
    %v340 = vmax.f32 %v339, 0.0
    %v341 = vadd.f32 %v336, %v157
    %342 = vrot.lane.b32.xlu0 %v340, 4
    %v343 = vpop.permute.xlu0 %342
    %v344 = vsel %vm50, %v343, 0.0
    %345 = vrot.lane.b32.xlu0 %v340, 2
    %v346 = vpop.permute.xlu0 %345
    %v347 = vsel %vm55, %v346, 0.0
    %348 = vmatprep.subr.mxu0 0.0
    %349 = vmatpush1.msra.mxu0 0.0
    %350 = vmatprep.subr.mxu0 0.0
    %351 = vmatpush1.msra.mxu0 0.0
    %352 = vmatprep.subr.mxu0 0.0
    %353 = vmatpush1.msra.mxu0 0.0
    %354 = vmatprep.subr.mxu0 0.0
    %355 = vmatpush1.msra.mxu0 0.0
    %356 = vmatprep.subr.mxu0 0.0
    %357 = vmatpush1.msra.mxu0 0.0
    %358 = vmatprep.subr.mxu0 0.0
    %359 = vmatpush1.msra.mxu0 0.0
    %360 = vmatprep.subr.mxu0 0.0
    %361 = vmatpush1.msra.mxu0 0.0
    %362 = vmatprep.subr.mxu0 0.0
    %363 = vmatpush1.msra.mxu0 0.0
    %364 = vmatprep.subr.mxu0 0.0
    %365 = vmatpush1.msra.mxu0 0.0
    %366 = vmatprep.subr.mxu0 0.0
    %367 = vmatpush1.msra.mxu0 0.0
    %368 = vmatprep.subr.mxu0 0.0
    %369 = vmatpush1.msra.mxu0 0.0
    %370 = vmatprep.subr.mxu0 0.0
    %371 = vmatpush1.msra.mxu0 0.0
    %372 = vmatprep.subr.mxu0 0.0
    %373 = vmatpush1.msra.mxu0 0.0
    %374 = vmatprep.subr.mxu0 0.0
    %375 = vmatpush1.msra.mxu0 %v340
    %376 = vmatprep.subr.mxu0 0.0
    %377 = vmatpush1.msra.mxu0 %v347
    %378 = vmatprep.subr.mxu0 0.0
    %379 = vmatpush1.msra.mxu0 %v344
    %380 = vmatprep.subr.mxu0 0.0
    %381 = vmatpush2.msra.mxu0 0.0
    %382 = vmatprep.subr.mxu0 0.0
    %383 = vmatpush2.msra.mxu0 0.0
    %384 = vmatprep.subr.mxu0 0.0
    %385 = vmatpush2.msra.mxu0 0.0
    %386 = vmatprep.subr.mxu0 0.0
    %387 = vmatpush2.msra.mxu0 0.0
    %388 = vmatprep.subr.mxu0 0.0
    %389 = vmatpush2.msra.mxu0 0.0
    %390 = vmatprep.subr.mxu0 0.0
    %391 = vmatpush2.msra.mxu0 0.0
    %392 = vmatprep.subr.mxu0 0.0
    %393 = vmatpush2.msra.mxu0 0.0
    %394 = vmatprep.subr.mxu0 0.0
    %395 = vmatpush2.msra.mxu0 0.0
    %396 = vmatprep.subr.mxu0 0.0
    %397 = vmatpush2.msra.mxu0 0.0
    %398 = vmatprep.subr.mxu0 0.0
    %399 = vmatpush2.msra.mxu0 0.0
    %400 = vmatprep.subr.mxu0 0.0
    %401 = vmatpush2.msra.mxu0 0.0
    %402 = vmatprep.subr.mxu0 0.0
    %403 = vmatpush2.msra.mxu0 0.0
    %404 = vmatprep.subr.mxu0 0.0
    %405 = vmatpush2.msra.mxu0 0.0
    %406 = vmatprep.subr.mxu0 0.0
    %407 = vmatpush2.msra.mxu0 0.0
    %408 = vmatprep.subr.mxu0 0.0
    %409 = vmatpush2.msra.mxu0 0.0
    %410 = vmatprep.subr.mxu0 0.0
    %411 = vmatpush2.msra.mxu0 0.0
    %412 = vmatprep.mubr.f32.mxu0 0.0
    %413 = vmatmul.mubr.f32.gmra.mxu0 %v173
    %v414 = vpop.f32.mrf.mxu0
    %v415 = vadd.f32 %v169, %v414
    %v416 = vpop.f32.mrf.mxu0
    %417 = vdwg.mxu0
    %v418 = vmax.f32 %v415, 0.0
    %v419 = vadd.f32 %v418, %v341
    %v420 = vmax.f32 %v419, 0.0
    %s421 = scalar_lea.vmem [#allocation5], 8
    %422 = vst [vmem:[%s421] sm:$0xff] %v420
    // Predicated region
    $region30: #{tpu_custom_call.1} parent=1 // pred_check
      _
    $region31: #{tpu_custom_call.1} parent=1 // pred_check_branch
      %424 = sbr.rel (0) target = $region33
    $region32: #{tpu_custom_call.1} parent=1 // pred_region
      %s426 = ssub.s32 256, 256
      %427 = vsyncadd [#allocation4], %s426
      %s428 = sshll.u32 [#allocation5], 4
      %s429 = int_to_ptr.vmem [resolvable:$true] %s428
      %434 = dma.vmem_to_hbm [thread:$0]  %s429, 256, %s6, [#allocation4], 128, 128, 8
    $region33: #{tpu_custom_call.1} parent=1 // pred_fallthru
      _
    // Predicated region
    $region34: #{tpu_custom_call.1} parent=1 // pred_check
      _
    $region35: #{tpu_custom_call.1} parent=1 // pred_check_branch
      %436 = sbr.rel (0) target = $region37
    $region36: #{tpu_custom_call.1} parent=1 // pred_region
      %437 = dma.done [#allocation4], 256
    $region37: #{tpu_custom_call.1} parent=1 // pred_fallthru
      _
    %438 = vsyncpa [#allocation3], 1
    %439 = vsyncpa [#allocation4], 1

</llo_original>
